<compile_context>
chip_gen: v7x
topology: tpu7x:2x2x1
jax: 0.10.0
libtpu: 0.0.40
codegen_flags: <defaults>
</compile_context>

<pallas_src>
import functools
import math

import jax
import jax.numpy as jnp
from jax.experimental import pallas as pl
from jax.experimental.pallas import tpu as pltpu


# --- shared single-range-reduction sin/cos ----------------------------------

_TWO_OVER_PI = 0.6366197723675814
# 3-term Cody-Waite split of pi/2 (leading terms exact in float32).
_PIO2_HI = 1.5703125
_PIO2_MED = 4.837512969970703125e-4
_PIO2_LO = 7.54978995489188216e-8


def _sincos(emb):
    """Return (sin(emb), cos(emb)) sharing one range reduction.

    One quadrant reduction of `emb`, one sin poly + one cos poly on the
    reduced argument, then cheap quadrant swaps/sign flips — vs. two fully
    independent jnp.sin / jnp.cos evaluations (each with its own reduction).
    """
    q = jnp.floor(emb * _TWO_OVER_PI + 0.5)          # nearest quadrant count
    qi = q.astype(jnp.int32)
    r = emb - q * _PIO2_HI
    r = r - q * _PIO2_MED
    r = r - q * _PIO2_LO                              # r in [-pi/4, pi/4]
    r2 = r * r
    # Minimax polynomials (Cephes sinf/cosf coefficients) on [-pi/4, pi/4].
    sin_r = r * (1.0 + r2 * (-1.6666654611e-1
                             + r2 * (8.3321608736e-3
                                     + r2 * (-1.9515295891e-4))))
    cos_r = (1.0 - 0.5 * r2
             + (r2 * r2) * (4.166664568298827e-2
                            + r2 * (-1.388731625493765e-3
                                    + r2 * 2.443315711809948e-5)))
    swap = (qi & 1) == 1
    sin_sign = jnp.where((qi & 2) == 2, -1.0, 1.0).astype(emb.dtype)
    cos_sign = jnp.where(((qi + 1) & 2) == 2, -1.0, 1.0).astype(emb.dtype)
    sin_v = jnp.where(swap, cos_r, sin_r) * sin_sign
    cos_v = jnp.where(swap, sin_r, cos_r) * cos_sign
    return sin_v, cos_v


# --- kernels -----------------------------------------------------------------

def _kernel_flat(x_ref, freqs_ref, o_ref, *, half_dim):
    # x_ref:     (tile_b, 1) f32, freqs_ref: (1, half_dim) f32 (resident)
    # o_ref:     (tile_b, 2*half_dim); half_dim % 128 == 0 -> both stores
    #            start at a lane multiple of 128 (unmasked vst).
    emb = x_ref[...] * freqs_ref[...]          # VPU broadcast-multiply
    s, c = _sincos(emb)                        # emb consumed once (shared red.)
    o_ref[:, :half_dim] = s.astype(o_ref.dtype)
    o_ref[:, half_dim:] = c.astype(o_ref.dtype)


def _kernel_split(x_ref, freqs_ref, o_ref):
    # o_ref: (tile_b, 2, half_dim); used when half_dim % 128 != 0 so that both
    # the sin plane and the cos plane are stored starting at lane 0.
    emb = x_ref[...] * freqs_ref[...]
    s, c = _sincos(emb)
    o_ref[:, 0, :] = s.astype(o_ref.dtype)
    o_ref[:, 1, :] = c.astype(o_ref.dtype)


# --- wrapper -----------------------------------------------------------------

def sinusoidal_pos_emb(x: jax.Array, dim: int, *,
                       out_dtype=jnp.float32,
                       tile_b: int | None = None) -> jax.Array:
    """Pallas TPU implementation of SinusoidalPosEmb.forward.

    Args:
      x:    (B,) float timesteps.
      dim:  embedding dimension (even, >= 4).
      out_dtype: output dtype (bf16 halves writeback when the consumer allows).
      tile_b: optional explicit batch tile (rounded to a multiple of 8).
    Returns:
      (B, dim) embeddings: [sin(x*freqs) | cos(x*freqs)].
    """
    assert x.ndim == 1, "x must be a 1-D vector of timesteps"
    assert dim % 2 == 0, "dim must be even"
    assert dim >= 4, "dim must be >= 4 (half_dim - 1 > 0)"

    b = x.shape[0]
    half_dim = dim // 2
    scale = math.log(10000.0) / (half_dim - 1)
    freqs = jnp.exp(
        jnp.arange(half_dim, dtype=jnp.float32) * (-scale)
    ).reshape(1, half_dim)
    x2d = x.astype(jnp.float32).reshape(b, 1)

    out_itemsize = jnp.dtype(out_dtype).itemsize
    lane_aligned = (half_dim % 128) == 0

    # --- per-row VMEM accounting (includes hidden lane/sublane padding) ------
    x_row_bytes = 128 * 4                              # (tile_b,1) pads to 128 lanes
    if lane_aligned:
        out_row_bytes = dim * out_itemsize             # (tile_b, dim), dim % 128 == 0
    else:
        # (tile_b, 2, half_dim): minor-two dims pad to (8, ceil128(half_dim)).
        out_row_bytes = 8 * (pl.cdiv(half_dim, 128) * 128) * out_itemsize
    row_bytes = out_row_bytes + x_row_bytes

    # --- batch-axis tiling ----------------------------------------------------
    if b <= 8:
        tile_b = b                                     # single full-array block
    else:
        if tile_b is None:
            # ~3 MiB per pipeline stage -> ~6 MiB double-buffered + freqs,
            # comfortably inside v5e's 16 MiB scoped-VMEM default.
            tile_b = max(8, ((3 << 20) // row_bytes) // 8 * 8)
        else:
            tile_b = max(8, (tile_b // 8) * 8)
        # Megacore: keep >= 2 grid blocks whenever b allows so the "parallel"
        # batch axis can be split across v7x's two TensorCores.
        tile_b = min(tile_b, max(8, (pl.cdiv(b, 2) // 8) * 8))

    grid = (pl.cdiv(b, tile_b),)                       # ragged last block is OK:
                                                       # OOB reads are bounded,
                                                       # OOB writes discarded.

    freqs_block_bytes = 8 * (pl.cdiv(half_dim, 128) * 128) * 4
    need_bytes = 2 * tile_b * row_bytes + freqs_block_bytes   # double-buffered
    vmem_limit = int(min(max(2 * need_bytes, 4 << 20), 64 << 20))

    if lane_aligned:
        kernel = functools.partial(_kernel_flat, half_dim=half_dim)
        out_shape = jax.ShapeDtypeStruct((b, dim), out_dtype)
        out_spec = pl.BlockSpec((tile_b, dim), lambda i: (i, 0))
    else:
        kernel = _kernel_split
        out_shape = jax.ShapeDtypeStruct((b, 2, half_dim), out_dtype)
        out_spec = pl.BlockSpec((tile_b, 2, half_dim), lambda i: (i, 0, 0))

    out = pl.pallas_call(
        kernel,
        out_shape=out_shape,
        grid=grid,
        in_specs=[
            pl.BlockSpec((tile_b, 1), lambda i: (i, 0)),
            pl.BlockSpec((1, half_dim), lambda i: (0, 0)),   # resident freqs
        ],
        out_specs=out_spec,
        compiler_params=pltpu.CompilerParams(
            dimension_semantics=("parallel",),
            vmem_limit_bytes=vmem_limit,
        ),
    )(x2d, freqs)

    if not lane_aligned:
        out = out.reshape(b, dim)    # contiguous merge -> metadata-only
    return out


# --- reference & test --------------------------------------------------------

def _reference(x: jax.Array, dim: int) -> jax.Array:
    half_dim = dim // 2
    scale = math.log(10000.0) / (half_dim - 1)
    freqs = jnp.exp(jnp.arange(half_dim, dtype=jnp.float32) * (-scale))
    emb = x[:, None] * freqs[None, :]
    return jnp.concatenate([jnp.sin(emb), jnp.cos(emb)], axis=-1)


if __name__ == "__main__":
    key = jax.random.PRNGKey(0)

    # 1) Lane-aligned path (dim=256 -> half_dim=128), small diffusion batch.
    #    tile_b is capped to 8 so grid=2 and both v7x TensorCores get work.
    batch, dim = 16, 256
    x = jax.random.uniform(key, (batch,), dtype=jnp.float32,
                           minval=0.0, maxval=1000.0)
    out = jax.block_until_ready(sinusoidal_pos_emb(x, dim))
    ref = _reference(x, dim)
    assert out.shape == (batch, dim) and out.dtype == jnp.float32
    assert jnp.allclose(out, ref, atol=5e-5, rtol=1e-4), "mismatch vs reference"

    # 2) Multi-block + ragged last block (no wrapper pad / output slice).
    key2 = jax.random.PRNGKey(1)
    batch2 = 100
    x2 = jax.random.uniform(key2, (batch2,), dtype=jnp.float32,
                            minval=0.0, maxval=1000.0)
    out2 = jax.block_until_ready(sinusoidal_pos_emb(x2, dim, tile_b=32))
    ref2 = _reference(x2, dim)
    assert out2.shape == (batch2, dim)
    assert jnp.allclose(out2, ref2, atol=5e-5, rtol=1e-4), "tiled mismatch"

    # 3) Non-128-multiple half_dim -> (B, 2, half_dim) lane-0-aligned layout.
    key3 = jax.random.PRNGKey(2)
    batch3, dim3 = 10, 192
    x3 = jax.random.uniform(key3, (batch3,), dtype=jnp.float32,
                            minval=0.0, maxval=1000.0)
    out3 = jax.block_until_ready(sinusoidal_pos_emb(x3, dim3))
    ref3 = _reference(x3, dim3)
    assert out3.shape == (batch3, dim3)
    assert jnp.allclose(out3, ref3, atol=5e-5, rtol=1e-4), "split-layout mismatch"

    # 4) bf16 output (half the writeback) — loose tolerance for the cast.
    out4 = jax.block_until_ready(
        sinusoidal_pos_emb(x, dim, out_dtype=jnp.bfloat16))
    assert out4.shape == (batch, dim) and out4.dtype == jnp.bfloat16
    assert jnp.allclose(out4.astype(jnp.float32), ref, atol=1e-2, rtol=1e-2)

    print("KERNEL_OK")
</pallas_src>

<mosaic_0001>
module attributes {stable_mosaic.version = 11 : i64} {
  func.func @_kernel_flat(%arg0: i32, %arg1: memref<8x1xf32, #tpu.memory_space<vmem>>, %arg2: memref<1x128xf32, #tpu.memory_space<vmem>>, %arg3: memref<8x256xf32, #tpu.memory_space<vmem>>) attributes {dimension_semantics = [#tpu.dimension_semantics<parallel>], iteration_bounds = array<i64: 2>, scalar_prefetch = 0 : i64, scratch_operands = 0 : i64, tpu.core_type = #tpu.core_type<tc>, window_params = [{transform_indices = @transform_0, window_bounds = array<i64: 8, 1>}, {pipeline_mode = #tpu.pipeline_mode<synchronous>, transform_indices = @transform_1, window_bounds = array<i64: 1, 128>}, {transform_indices = @transform_2, window_bounds = array<i64: 8, 256>}]} {
    %c0 = arith.constant 0 : index
    %c0_0 = arith.constant 0 : index
    %0 = vector.load %arg1[%c0, %c0_0] : memref<8x1xf32, #tpu.memory_space<vmem>>, vector<8x1xf32>
    %c0_1 = arith.constant 0 : index
    %c0_2 = arith.constant 0 : index
    %1 = vector.load %arg2[%c0_1, %c0_2] : memref<1x128xf32, #tpu.memory_space<vmem>>, vector<1x128xf32>
    %2 = vector.broadcast %0 : vector<8x1xf32> to vector<8x128xf32>
    %3 = vector.broadcast %1 : vector<1x128xf32> to vector<8x128xf32>
    %4 = arith.mulf %2, %3 : vector<8x128xf32>
    %cst = arith.constant 0.636619746 : f32
    %5 = vector.broadcast %cst : f32 to vector<8x128xf32>
    %6 = arith.mulf %4, %5 : vector<8x128xf32>
    %cst_3 = arith.constant 5.000000e-01 : f32
    %7 = vector.broadcast %cst_3 : f32 to vector<8x128xf32>
    %8 = arith.addf %6, %7 : vector<8x128xf32>
    %9 = math.floor %8 : vector<8x128xf32>
    %10 = arith.fptosi %9 : vector<8x128xf32> to vector<8x128xi32>
    %cst_4 = arith.constant 1.5703125 : f32
    %11 = vector.broadcast %cst_4 : f32 to vector<8x128xf32>
    %12 = arith.mulf %9, %11 : vector<8x128xf32>
    %13 = arith.subf %4, %12 : vector<8x128xf32>
    %cst_5 = arith.constant 4.83751297E-4 : f32
    %14 = vector.broadcast %cst_5 : f32 to vector<8x128xf32>
    %15 = arith.mulf %9, %14 : vector<8x128xf32>
    %16 = arith.subf %13, %15 : vector<8x128xf32>
    %cst_6 = arith.constant 7.549790e-08 : f32
    %17 = vector.broadcast %cst_6 : f32 to vector<8x128xf32>
    %18 = arith.mulf %9, %17 : vector<8x128xf32>
    %19 = arith.subf %16, %18 : vector<8x128xf32>
    %20 = arith.mulf %19, %19 : vector<8x128xf32>
    %cst_7 = arith.constant -1.95152956E-4 : f32
    %21 = vector.broadcast %cst_7 : f32 to vector<8x128xf32>
    %22 = arith.mulf %20, %21 : vector<8x128xf32>
    %cst_8 = arith.constant 0.00833216123 : f32
    %23 = vector.broadcast %cst_8 : f32 to vector<8x128xf32>
    %24 = arith.addf %23, %22 : vector<8x128xf32>
    %25 = arith.mulf %20, %24 : vector<8x128xf32>
    %cst_9 = arith.constant -0.166666552 : f32
    %26 = vector.broadcast %cst_9 : f32 to vector<8x128xf32>
    %27 = arith.addf %26, %25 : vector<8x128xf32>
    %28 = arith.mulf %20, %27 : vector<8x128xf32>
    %cst_10 = arith.constant 1.000000e+00 : f32
    %29 = vector.broadcast %cst_10 : f32 to vector<8x128xf32>
    %30 = arith.addf %29, %28 : vector<8x128xf32>
    %31 = arith.mulf %19, %30 : vector<8x128xf32>
    %cst_11 = arith.constant 5.000000e-01 : f32
    %32 = vector.broadcast %cst_11 : f32 to vector<8x128xf32>
    %33 = arith.mulf %32, %20 : vector<8x128xf32>
    %cst_12 = arith.constant 1.000000e+00 : f32
    %34 = vector.broadcast %cst_12 : f32 to vector<8x128xf32>
    %35 = arith.subf %34, %33 : vector<8x128xf32>
    %36 = arith.mulf %20, %20 : vector<8x128xf32>
    %cst_13 = arith.constant 2.44331568E-5 : f32
    %37 = vector.broadcast %cst_13 : f32 to vector<8x128xf32>
    %38 = arith.mulf %20, %37 : vector<8x128xf32>
    %cst_14 = arith.constant -0.00138873165 : f32
    %39 = vector.broadcast %cst_14 : f32 to vector<8x128xf32>
    %40 = arith.addf %39, %38 : vector<8x128xf32>
    %41 = arith.mulf %20, %40 : vector<8x128xf32>
    %cst_15 = arith.constant 0.0416666456 : f32
    %42 = vector.broadcast %cst_15 : f32 to vector<8x128xf32>
    %43 = arith.addf %42, %41 : vector<8x128xf32>
    %44 = arith.mulf %36, %43 : vector<8x128xf32>
    %45 = arith.addf %35, %44 : vector<8x128xf32>
    %c1_i32 = arith.constant 1 : i32
    %46 = vector.broadcast %c1_i32 : i32 to vector<8x128xi32>
    %47 = arith.andi %10, %46 : vector<8x128xi32>
    %c1_i32_16 = arith.constant 1 : i32
    %48 = vector.broadcast %c1_i32_16 : i32 to vector<8x128xi32>
    %49 = arith.cmpi eq, %47, %48 : vector<8x128xi32>
    %c2_i32 = arith.constant 2 : i32
    %50 = vector.broadcast %c2_i32 : i32 to vector<8x128xi32>
    %51 = arith.andi %10, %50 : vector<8x128xi32>
    %c2_i32_17 = arith.constant 2 : i32
    %52 = vector.broadcast %c2_i32_17 : i32 to vector<8x128xi32>
    %53 = arith.cmpi eq, %51, %52 : vector<8x128xi32>
    %cst_18 = arith.constant -1.000000e+00 : f32
    %cst_19 = arith.constant 1.000000e+00 : f32
    %54 = vector.broadcast %cst_18 : f32 to vector<8x128xf32>
    %55 = vector.broadcast %cst_19 : f32 to vector<8x128xf32>
    %56 = arith.select %53, %54, %55 : vector<8x128xi1>, vector<8x128xf32>
    %c1_i32_20 = arith.constant 1 : i32
    %57 = vector.broadcast %c1_i32_20 : i32 to vector<8x128xi32>
    %58 = arith.addi %10, %57 : vector<8x128xi32>
    %c2_i32_21 = arith.constant 2 : i32
    %59 = vector.broadcast %c2_i32_21 : i32 to vector<8x128xi32>
    %60 = arith.andi %58, %59 : vector<8x128xi32>
    %c2_i32_22 = arith.constant 2 : i32
    %61 = vector.broadcast %c2_i32_22 : i32 to vector<8x128xi32>
    %62 = arith.cmpi eq, %60, %61 : vector<8x128xi32>
    %cst_23 = arith.constant -1.000000e+00 : f32
    %cst_24 = arith.constant 1.000000e+00 : f32
    %63 = vector.broadcast %cst_23 : f32 to vector<8x128xf32>
    %64 = vector.broadcast %cst_24 : f32 to vector<8x128xf32>
    %65 = arith.select %62, %63, %64 : vector<8x128xi1>, vector<8x128xf32>
    %66 = arith.select %49, %45, %31 : vector<8x128xi1>, vector<8x128xf32>
    %67 = arith.mulf %66, %56 : vector<8x128xf32>
    %68 = arith.select %49, %31, %45 : vector<8x128xi1>, vector<8x128xf32>
    %69 = arith.mulf %68, %65 : vector<8x128xf32>
    %c0_25 = arith.constant 0 : index
    %c0_26 = arith.constant 0 : index
    %70 = vector.load %arg3[%c0_25, %c0_26] : memref<8x256xf32, #tpu.memory_space<vmem>>, vector<8x128xf32>
    tpu.vector_store %arg3[%c0_25, %c0_26], %67 {strides = array<i32>} : memref<8x256xf32, #tpu.memory_space<vmem>>, vector<8x128xf32>,
    %c0_27 = arith.constant 0 : index
    %c128 = arith.constant 128 : index
    %71 = vector.load %arg3[%c0_27, %c128] : memref<8x256xf32, #tpu.memory_space<vmem>>, vector<8x128xf32>
    tpu.vector_store %arg3[%c0_27, %c128], %69 {strides = array<i32>} : memref<8x256xf32, #tpu.memory_space<vmem>>, vector<8x128xf32>,
    return
  }
  func.func @transform_0(%arg0: i32) -> (i32, i32) {
    %c0_i32 = arith.constant 0 : i32
    %c0_i32_0 = arith.constant 0 : i32
    return %arg0, %c0_i32 : i32, i32
  }
  func.func @transform_1(%arg0: i32) -> (i32, i32) {
    %c0_i32 = arith.constant 0 : i32
    %c0_i32_0 = arith.constant 0 : i32
    %c0_i32_1 = arith.constant 0 : i32
    return %c0_i32, %c0_i32_0 : i32, i32
  }
  func.func @transform_2(%arg0: i32) -> (i32, i32) {
    %c0_i32 = arith.constant 0 : i32
    %c0_i32_0 = arith.constant 0 : i32
    return %arg0, %c0_i32 : i32, i32
  }
}

</mosaic_0001>

<llo_original>
// kernel: tpu_custom_call.1
$region0: #{tpu_custom_call.1}
  #allocation0 [shape = 'u32[]', space=smem, size = 0x4, offset = 0x4, fixed_abs, tag = 'smem constant byte address 0x4 - core index']
  #allocation1 [shape = 'u32[144,128]{1,0:T(1,128)}', space=vmem, size = 0x12000, scoped, tag = 'internal scratch']
  %s0 = inlined_call_operand.vmem [shape: f32[16,1], index: 0, kind: input, shape index: {}]
  %s1 = inlined_call_operand.vmem [shape: f32[1,128], index: 1, kind: input, shape index: {}]
  %s2 = inlined_call_operand.hbm [shape: f32[16,256], index: 2, kind: output, shape index: {}]
  %s3 = sld [smem:[#allocation0]]
  $region41: #{tpu_custom_call.1} parent=0
    _
  %s5 = ssub.s32 1, %s3
  %s6 = scalar_select 0, %s5, %s3
  $region1: #{tpu_custom_call.1} parent=0
    #allocation2 [shape = 'u8[16384]{0}', space=vmem, size = 0x4000, scoped, tag = 'output window, operand 0']
    #allocation3 [shape = 's32[2]{0}', space=sflag, size = 0x8, scoped, tag = 'scoped memory for tpu_custom_call.1']
    %7 = vsyncpa [#allocation3], 0
    %s8 = scalar_lea.sflag [#allocation3], 1
    %9 = vsyncpa %s8, 0
    loop: start=0, step=1, limit=4
    $region2: #{tpu_custom_call.1} parent=1 // loop_pre_header
      _
    $region3: #{tpu_custom_call.1} parent=1 // loop_header
      %s11 = sphi 0, %s15
      %p12 = scmp.ge.s32.totalorder %s11, 4
      %s21 = sphi 0, %s23
      %s24 = sphi 0, %s21
      %s25 = sphi 0, %s24
      %s41 = sphi 0, %s25
      %s45 = sphi 0, %s45
      %s47 = sphi 0, %s45
      %s48 = sphi 0, %s47
      %s62 = sphi 0, %s48
      %s68 = sphi 0, %s70
      %s71 = sphi 0, %s68
      %s72 = sphi 0, %s71
      %s88 = sphi 0, %s72
    $region4: #{tpu_custom_call.1} parent=1 // loop_header_branch
      %14 = sbr.rel (%p12) target = $region8
    $region5: #{tpu_custom_call.1} parent=1 // loop_body
      %s16 = ssub.s32 %s11, 1
      %s17 = ssub.s32 %s11, 2
      %s18 = sadd.s32 %s11, 1
      %s19 = ssub.s32 %s11, %s18
      %p20 = scmp.eq.s32.totalorder %s19, 0
      %s22 = sadd.s32 %s21, 1
      %s23 = scalar_select %p20, %s21, %s22
      %p26 = pneg %p20
      %p27 = scmp.eq.s32.totalorder %s11, 1
      %p28 = por %p26, %p27
      %p29 = scmp.ne.s32.totalorder %s21, %s24
      %p30 = scmp.eq.s32.totalorder %s11, 0
      %p31 = por %p29, %p30
      %p32 = scmp.ne.s32.totalorder %s21, %s24
      %p33 = scmp.eq.s32.totalorder %s16, 1
      %p34 = por %p32, %p33
      %p35 = scmp.ne.s32.totalorder %s24, %s25
      %p36 = scmp.eq.s32.totalorder %s16, 0
      %p37 = por %p35, %p36
      %p38 = scmp.ne.s32.totalorder %s24, %s25
      %p39 = scmp.eq.s32.totalorder %s17, 1
      %p40 = por %p38, %p39
      %p42 = scmp.ne.s32.totalorder %s25, %s41
      %p43 = scmp.eq.s32.totalorder %s17, 0
      %p44 = por %p42, %p43
      %s46 = sadd.s32 %s45, 1
      %p49 = scmp.eq.s32.totalorder %s11, 1
      %p50 = scmp.ne.s32.totalorder %s45, %s47
      %p51 = scmp.eq.s32.totalorder %s11, 0
      %p52 = por %p50, %p51
      %p53 = scmp.ne.s32.totalorder %s45, %s47
      %p54 = scmp.eq.s32.totalorder %s16, 1
      %p55 = por %p53, %p54
      %p56 = scmp.ne.s32.totalorder %s47, %s48
      %p57 = scmp.eq.s32.totalorder %s16, 0
      %p58 = por %p56, %p57
      %p59 = scmp.ne.s32.totalorder %s47, %s48
      %p60 = scmp.eq.s32.totalorder %s17, 1
      %p61 = por %p59, %p60
      %p63 = scmp.ne.s32.totalorder %s48, %s62
      %p64 = scmp.eq.s32.totalorder %s17, 0
      %p65 = por %p63, %p64
      %s66 = ssub.s32 %s11, %s18
      %p67 = scmp.eq.s32.totalorder %s66, 0
      %s69 = sadd.s32 %s68, 1
      %s70 = scalar_select %p67, %s68, %s69
      %p73 = pneg %p67
      %p74 = scmp.eq.s32.totalorder %s11, 1
      %p75 = por %p73, %p74
      %p76 = scmp.ne.s32.totalorder %s68, %s71
      %p77 = scmp.eq.s32.totalorder %s11, 0
      %p78 = por %p76, %p77
      %p79 = scmp.ne.s32.totalorder %s68, %s71
      %p80 = scmp.eq.s32.totalorder %s16, 1
      %p81 = por %p79, %p80
      %p82 = scmp.ne.s32.totalorder %s71, %s72
      %p83 = scmp.eq.s32.totalorder %s16, 0
      %p84 = por %p82, %p83
      %p85 = scmp.ne.s32.totalorder %s71, %s72
      %p86 = scmp.eq.s32.totalorder %s17, 1
      %p87 = por %p85, %p86
      %p89 = scmp.ne.s32.totalorder %s72, %s88
      %p90 = scmp.eq.s32.totalorder %s17, 0
      %p91 = por %p89, %p90
      %p92 = scmp.le.s32.totalorder 1, %s11
      %p93 = scmp.lt.s32.totalorder %s11, 3
      %p94 = pnand %p92, %p93
      %p95 = pneg %p94
      // Predicated region
      $region9: #{tpu_custom_call.1} parent=5 // pred_check
        _
      $region10: #{tpu_custom_call.1} parent=5 // pred_check_branch
        %97 = sbr.rel (%p94) target = $region12
      $region11: #{tpu_custom_call.1} parent=5 // pred_region
        %s98 = ssub.s32 %s11, 1
        // Predicated region
        $region13: #{tpu_custom_call.1} parent=11 // pred_check
          %p99 = pneg %p58
        $region14: #{tpu_custom_call.1} parent=11 // pred_check_branch
          %101 = sbr.rel (%p99) target = $region16
        $region15: #{tpu_custom_call.1} parent=11 // pred_region
          _
        $region16: #{tpu_custom_call.1} parent=11 // pred_fallthru
          _
      $region12: #{tpu_custom_call.1} parent=5 // pred_fallthru
        _
      %p102 = scmp.lt.s32.totalorder %s11, 2
      // Predicated region
      $region17: #{tpu_custom_call.1} parent=5 // pred_check
        %p103 = pneg %p102
      $region18: #{tpu_custom_call.1} parent=5 // pred_check_branch
        %105 = sbr.rel (%p103) target = $region20
      $region19: #{tpu_custom_call.1} parent=5 // pred_region
        // Predicated region
        $region21: #{tpu_custom_call.1} parent=19 // pred_check
          %p106 = pneg %p31
        $region22: #{tpu_custom_call.1} parent=19 // pred_check_branch
          %108 = sbr.rel (%p106) target = $region24
        $region23: #{tpu_custom_call.1} parent=19 // pred_region
          %p109 = scmp.lt.s32.totalorder %s11, 1
          %s110 = scalar_select %p109, %s11, 1
          %s111 = smul.addr %s110, 8
          %s112 = scalar_lea.vmem %s0, %s111
        $region24: #{tpu_custom_call.1} parent=19 // pred_fallthru
          _
      $region20: #{tpu_custom_call.1} parent=5 // pred_fallthru
        _
      %p113 = scmp.le.s32.totalorder 1, %s11
      %p114 = scmp.lt.s32.totalorder %s11, 3
      %p115 = pnand %p113, %p114
      %p116 = pneg %p115
      // Predicated region
      $region25: #{tpu_custom_call.1} parent=5 // pred_check
        _
      $region26: #{tpu_custom_call.1} parent=5 // pred_check_branch
        %118 = sbr.rel (%p115) target = $region28
      $region27: #{tpu_custom_call.1} parent=5 // pred_region
        %s119 = ssub.s32 %s11, 1
        %p120 = scmp.lt.s32.totalorder %s16, 1
        %s121 = scalar_select %p120, %s16, 1
        %s122 = smul.addr %s121, 8
        %s123 = scalar_lea.vmem %s0, %s122
        %p124 = pneg %p37
        %p125 = pneg %p34
        %p126 = pneg %p58
        %p127 = pneg %p55
        %p128 = pneg %p84
        %p129 = pneg %p81
        %s130 = sand.u32 %s71, 1
        %s131 = scalar_lea.sflag [#allocation3], %s130
        %s132 = sand.u32 %s71, 1
        %s133 = smul.addr %s132, 16
        %s134 = scalar_lea.vmem [#allocation2], %s133
        %p135 = scmp.lt.s32.totalorder %s16, 1
        %s136 = scalar_select %p135, %s16, 1
        %s137 = smul.addr %s136, 8
        %s138 = scalar_lea.vmem %s0, %s137
        %v139 = vld [vmem:[%s138] sm:$0xff]
        %v140 = vld [vmem:[%s1] sm:$0x1]
        %142 = vset.pattern.permute.xlu0 0
        %143 = vperm.xlu0 %142, %v139
        %v144 = vpop.permute.xlu0 %143
        %v147 = vlaneseq
        %v148 = vshrl.u32 %v147, 7
        %v149 = vsub.s32 0, %v148
        %v150 = vrot.slane %v140, %v149
        %v152 = vmul.f32 %v144, %v150
        %v153 = vmul.f32 %v152, 0.63661975
        %v154 = vadd.f32 %v153, 0.5
        %v155 = vfloor.f32 %v154
        %v156 = vcvt.f32.s32.to.zero.pseudo %v155
        %v157 = vmul.f32 %v155, 1.5703125
        %v158 = vsub.f32 %v152, %v157
        %v159 = vmul.f32 %v155, 0.0004837513
        %v160 = vsub.f32 %v158, %v159
        %v161 = vmul.f32 %v155, 7.54979e-08
        %v162 = vsub.f32 %v160, %v161
        %v163 = vmul.f32 %v162, %v162
        %v164 = vmul.f32 %v163, -0.00019515296
        %v165 = vadd.f32 %v164, 0.008332161
        %v166 = vmul.f32 %v163, %v165
        %v167 = vadd.f32 %v166, -0.16666655
        %v168 = vmul.f32 %v163, %v167
        %v169 = vadd.f32 %v168, 1.0
        %v170 = vmul.f32 %v162, %v169
        %v171 = vmul.f32 %v163, 0.5
        %v172 = vsub.f32 1.0, %v171
        %v173 = vmul.f32 %v163, %v163
        %v174 = vmul.f32 %v163, 2.4433157e-05
        %v175 = vadd.f32 %v174, -0.0013887316
        %v176 = vmul.f32 %v163, %v175
        %v177 = vadd.f32 %v176, 0.041666646
        %v178 = vmul.f32 %v173, %v177
        %v179 = vadd.f32 %v172, %v178
        %v180 = vand.u32 %v156, 1
        %vm181 = vcmp.eq.s32.totalorder %v180, 1
        %v182 = vand.u32 %v156, 2
        %vm183 = vcmp.eq.s32.totalorder %v182, 2
        %v184 = vsel %vm183, -1.0, 1.0
        %v185 = vadd.s32 %v156, 1
        %v186 = vand.u32 %v185, 2
        %vm187 = vcmp.eq.s32.totalorder %v186, 2
        %v188 = vsel %vm187, -1.0, 1.0
        %v189 = vsel %vm181, %v179, %v170
        %v190 = vmul.f32 %v189, %v184
        %v191 = vsel %vm181, %v170, %v179
        %v192 = vmul.f32 %v191, %v188
        %193 = vst [vmem:[%s134] sm:$0xff] %v190
        %194 = vst [vmem:[%s134 + $0x8] sm:$0xff] %v192
        %s195 = sand.u32 %s71, 1
        %s196 = scalar_lea.sflag [#allocation3], %s195
        %s197 = sand.u32 %s71, 1
        %s198 = smul.addr %s197, 16
        %s199 = scalar_lea.vmem [#allocation2], %s198
        // Predicated region
        $region29: #{tpu_custom_call.1} parent=27 // pred_check
          %p200 = pneg %p81
        $region30: #{tpu_custom_call.1} parent=27 // pred_check_branch
          %202 = sbr.rel (%p200) target = $region32
        $region31: #{tpu_custom_call.1} parent=27 // pred_region
          %s204 = ssub.s32 256, 256
          %205 = vsyncadd %s196, %s204
          %s206 = smul.addr %s16, 2
          %s207 = smul.addr %s206, 128
          %s208 = scalar_lea.hbm %s2, %s207
          %s210 = sshll.u32 %s199, 4
          %s211 = int_to_ptr.vmem [resolvable:$true] %s210
          %213 = dma.vmem_to_hbm [thread:$0]  %s211, 256, %s208, %s196
        $region32: #{tpu_custom_call.1} parent=27 // pred_fallthru
          _
      $region28: #{tpu_custom_call.1} parent=5 // pred_fallthru
        _
      %p214 = scmp.le.s32.totalorder 2, %s11
      // Predicated region
      $region33: #{tpu_custom_call.1} parent=5 // pred_check
        %p215 = pneg %p214
      $region34: #{tpu_custom_call.1} parent=5 // pred_check_branch
        %217 = sbr.rel (%p215) target = $region36
      $region35: #{tpu_custom_call.1} parent=5 // pred_region
        %s218 = ssub.s32 %s11, 2
        // Predicated region
        $region37: #{tpu_custom_call.1} parent=35 // pred_check
          %p219 = pneg %p87
        $region38: #{tpu_custom_call.1} parent=35 // pred_check_branch
          %221 = sbr.rel (%p219) target = $region40
        $region39: #{tpu_custom_call.1} parent=35 // pred_region
          %s222 = sand.u32 %s72, 1
          %s223 = scalar_lea.sflag [#allocation3], %s222
          %s224 = sand.u32 %s72, 1
          %s225 = smul.addr %s224, 16
          %s226 = scalar_lea.vmem [#allocation2], %s225
          %227 = dma.done %s223, 256
        $region40: #{tpu_custom_call.1} parent=35 // pred_fallthru
          _
      $region36: #{tpu_custom_call.1} parent=5 // pred_fallthru
        _
    $region6: #{tpu_custom_call.1} parent=1 // loop_footer
      %s15 = sadd.s32 1, %s11
    $region7: #{tpu_custom_call.1} parent=1 // loop_footer_branch
      %10 = sbr.rel target = $region3
    $region8: #{tpu_custom_call.1} parent=1 // loop_exit
      _
    %228 = vsyncpa [#allocation3], 1
    %s229 = scalar_lea.sflag [#allocation3], 1
    %230 = vsyncpa %s229, 1

</llo_original>
